<compile_context>
chip_gen: v7x
topology: tpu7x:2x2x1
jax: 0.10.0
libtpu: 0.0.40
codegen_flags: <defaults>
</compile_context>

<pallas_src>
import jax
import jax.numpy as jnp
from jax.experimental import pallas as pl
from jax.experimental.pallas import tpu as pltpu


def _make_route_kernel(c2_len: int, c1_len: int):
    """c2_len = C2*H*W elements per image of x2, c1_len = C1*H*W of x1."""

    def kernel(x2_hbm, x1_hbm, out_hbm, sems):
        # x2_hbm: (N, c2_len), x1_hbm: (N, c1_len), out_hbm: (N, c2_len + c1_len)
        # Two large strided DMAs, each with its own semaphore; start both,
        # then wait both so they overlap on the DMA engines.
        cp2 = pltpu.make_async_copy(
            x2_hbm, out_hbm.at[:, pl.ds(0, c2_len)], sems.at[0])
        cp1 = pltpu.make_async_copy(
            x1_hbm, out_hbm.at[:, pl.ds(c2_len, c1_len)], sems.at[1])
        cp2.start()
        cp1.start()
        cp2.wait()
        cp1.wait()

    return kernel


def route(x1, x2):
    """x1: (N, C1, H, W) previous output; x2: (N, C2, H, W) current output.
    Returns (N, C2 + C1, H, W) == concat([x2, x1], axis=1)."""
    assert x1.shape[0] == x2.shape[0], (x1.shape, x2.shape)
    assert x1.shape[2:] == x2.shape[2:], (x1.shape, x2.shape)
    assert x1.dtype == x2.dtype, (x1.dtype, x2.dtype)

    N, C1, H, W = x1.shape
    C2 = x2.shape[1]
    HW = H * W
    C_out = C1 + C2
    c1_len = C1 * HW
    c2_len = C2 * HW

    # Flatten each image to one contiguous row; the concat boundary becomes a
    # plain element offset with no lane/sublane alignment requirements.
    # (Free only for standard row-major-contiguous inputs; otherwise XLA
    # inserts a real copy here.)
    x1f = x1.reshape(N, c1_len)
    x2f = x2.reshape(N, c2_len)

    itemsize = jnp.dtype(x1.dtype).itemsize
    bytes_moved = 2 * N * C_out * HW * itemsize  # every element read + written once

    out_flat = pl.pallas_call(
        _make_route_kernel(c2_len, c1_len),
        out_shape=jax.ShapeDtypeStruct((N, c2_len + c1_len), x1.dtype),
        in_specs=[
            pl.BlockSpec(memory_space=pl.ANY),   # x2 stays in HBM (no auto-DMA)
            pl.BlockSpec(memory_space=pl.ANY),   # x1 stays in HBM
        ],
        out_specs=pl.BlockSpec(memory_space=pl.ANY),  # DMA directly into HBM output
        scratch_shapes=[pltpu.SemaphoreType.DMA((2,))],
        cost_estimate=pl.CostEstimate(
            flops=0, transcendentals=0, bytes_accessed=bytes_moved),
    )(x2f, x1f)

    return out_flat.reshape(N, C_out, H, W)


if __name__ == "__main__":
    key = jax.random.PRNGKey(0)
    k1, k2 = jax.random.split(key)
    # Small shapes consistent with the module's NCHW feature-map inputs.
    x1 = jax.random.normal(k1, (2, 4, 16, 16), dtype=jnp.float32)  # previous output
    x2 = jax.random.normal(k2, (2, 4, 16, 16), dtype=jnp.float32)  # current output

    out = route(x1, x2)
    jax.block_until_ready(out)

    ref = jnp.concatenate([x2, x1], axis=1)
    assert out.shape == ref.shape, (out.shape, ref.shape)
    assert jnp.array_equal(out, ref), "mismatch vs reference concat"

    print("KERNEL_OK")
</pallas_src>

<mosaic_0001>
module attributes {stable_mosaic.version = 11 : i64} {
  func.func @kernel(%arg0: memref<2x1024xf32, #tpu.memory_space<any>>, %arg1: memref<2x1024xf32, #tpu.memory_space<any>>, %arg2: memref<2x2048xf32, #tpu.memory_space<any>>, %arg3: memref<2x!tpu.dma_semaphore, #tpu.memory_space<semaphore_mem>>) attributes {dimension_semantics = [], scalar_prefetch = 0 : i64, scratch_operands = 1 : i64, tpu.core_type = #tpu.core_type<tc>} {
    %c0_i32 = arith.constant 0 : i32
    %c0_i32_0 = arith.constant 0 : i32
    %c0_i32_1 = arith.constant 0 : i32
    %0 = tpu.memref_slice %arg2[%c0_i32_0, %c0_i32_1] : memref<2x2048xf32, #tpu.memory_space<any>> -> memref<2x1024xf32, #tpu.memory_space<any>>
    %1 = tpu.memref_slice %arg3[%c0_i32] : memref<2x!tpu.dma_semaphore, #tpu.memory_space<semaphore_mem>> -> memref<1x!tpu.dma_semaphore, #tpu.memory_space<semaphore_mem>>
    %2 = tpu.memref_squeeze %1 : memref<1x!tpu.dma_semaphore, #tpu.memory_space<semaphore_mem>> -> memref<!tpu.dma_semaphore, #tpu.memory_space<semaphore_mem>>
    tpu.enqueue_dma source(%arg0 : memref<2x1024xf32, #tpu.memory_space<any>>) target(%0 : memref<2x1024xf32, #tpu.memory_space<any>>) target_semaphore(%2 : memref<!tpu.dma_semaphore, #tpu.memory_space<semaphore_mem>>)
    %c1_i32 = arith.constant 1 : i32
    %c0_i32_2 = arith.constant 0 : i32
    %c1024_i32 = arith.constant 1024 : i32
    %3 = tpu.memref_slice %arg2[%c0_i32_2, %c1024_i32] : memref<2x2048xf32, #tpu.memory_space<any>> -> memref<2x1024xf32, #tpu.memory_space<any>>
    %4 = tpu.memref_slice %arg3[%c1_i32] : memref<2x!tpu.dma_semaphore, #tpu.memory_space<semaphore_mem>> -> memref<1x!tpu.dma_semaphore, #tpu.memory_space<semaphore_mem>>
    %5 = tpu.memref_squeeze %4 : memref<1x!tpu.dma_semaphore, #tpu.memory_space<semaphore_mem>> -> memref<!tpu.dma_semaphore, #tpu.memory_space<semaphore_mem>>
    tpu.enqueue_dma source(%arg1 : memref<2x1024xf32, #tpu.memory_space<any>>) target(%3 : memref<2x1024xf32, #tpu.memory_space<any>>) target_semaphore(%5 : memref<!tpu.dma_semaphore, #tpu.memory_space<semaphore_mem>>)
    %c0_i32_3 = arith.constant 0 : i32
    %c0_i32_4 = arith.constant 0 : i32
    %c0_i32_5 = arith.constant 0 : i32
    %6 = tpu.memref_slice %arg2[%c0_i32_4, %c0_i32_5] : memref<2x2048xf32, #tpu.memory_space<any>> -> memref<2x1024xf32, #tpu.memory_space<any>>
    %7 = tpu.memref_slice %arg3[%c0_i32_3] : memref<2x!tpu.dma_semaphore, #tpu.memory_space<semaphore_mem>> -> memref<1x!tpu.dma_semaphore, #tpu.memory_space<semaphore_mem>>
    %8 = tpu.memref_squeeze %7 : memref<1x!tpu.dma_semaphore, #tpu.memory_space<semaphore_mem>> -> memref<!tpu.dma_semaphore, #tpu.memory_space<semaphore_mem>>
    tpu.wait_dma2 semaphore(%8 : memref<!tpu.dma_semaphore, #tpu.memory_space<semaphore_mem>>) src(%arg0 : memref<2x1024xf32, #tpu.memory_space<any>>) dst(%6 : memref<2x1024xf32, #tpu.memory_space<any>>)
    %c1_i32_6 = arith.constant 1 : i32
    %c0_i32_7 = arith.constant 0 : i32
    %c1024_i32_8 = arith.constant 1024 : i32
    %9 = tpu.memref_slice %arg2[%c0_i32_7, %c1024_i32_8] : memref<2x2048xf32, #tpu.memory_space<any>> -> memref<2x1024xf32, #tpu.memory_space<any>>
    %10 = tpu.memref_slice %arg3[%c1_i32_6] : memref<2x!tpu.dma_semaphore, #tpu.memory_space<semaphore_mem>> -> memref<1x!tpu.dma_semaphore, #tpu.memory_space<semaphore_mem>>
    %11 = tpu.memref_squeeze %10 : memref<1x!tpu.dma_semaphore, #tpu.memory_space<semaphore_mem>> -> memref<!tpu.dma_semaphore, #tpu.memory_space<semaphore_mem>>
    tpu.wait_dma2 semaphore(%11 : memref<!tpu.dma_semaphore, #tpu.memory_space<semaphore_mem>>) src(%arg1 : memref<2x1024xf32, #tpu.memory_space<any>>) dst(%9 : memref<2x1024xf32, #tpu.memory_space<any>>)
    return
  }
}

</mosaic_0001>

<llo_original>
// kernel: tpu_custom_call.1
$region0: #{tpu_custom_call.1}
  #allocation0 [shape = 'u32[]', space=smem, size = 0x4, offset = 0x4, fixed_abs, tag = 'smem constant byte address 0x4 - core index']
  #allocation1 [shape = 'u32[144,128]{1,0:T(1,128)}', space=vmem, size = 0x12000, scoped, tag = 'internal scratch']
  #allocation2 [shape = 's32[2]{0}', space=sflag, size = 0x8, scoped, tag = 'scratch operand']
  #allocation3 [shape = 's32[]', space=sflag, size = 0x4, offset = 0, fixed_abs, tag = 'sflag constant byte address 0x0 - dummy sync flag']
  #allocation4 [shape = 'u32[0]{0}', space=smem, size = 0, offset = 0, fixed_abs, tag = 'smem constant byte address 0x0 - null']
  #allocation5 [shape = 's32[]', space=sflag, size = 0x4, offset = 0, fixed_abs, tag = 'sflag constant byte address 0x0 - dummy sync flag']
  #allocation6 [shape = 'u32[0]{0}', space=smem, size = 0, offset = 0, fixed_abs, tag = 'smem constant byte address 0x0 - null']
  %s0 = inlined_call_operand.hbm [shape: f32[2,1024], index: 0, kind: input, shape index: {}]
  %s1 = inlined_call_operand.hbm [shape: f32[2,1024], index: 1, kind: input, shape index: {}]
  %s2 = inlined_call_operand.hbm [shape: f32[2,2048], index: 2, kind: output, shape index: {}]
  %s3 = sld [smem:[#allocation0]]
  $region2: #{tpu_custom_call.1} parent=0
    _
  %s5 = ssub.s32 1, %s3
  %s6 = scalar_select 0, %s5, %s3
  %s8 = sshll.u32 1, 14
  %s9 = sxor.u32 4294967295, %s8
  %s12 = sshll.u32 3, 24
  %s13 = sxor.u32 4294967295, %s12
  %s14 = sand.u32 0, %s13
  %s16 = sor.u32 %s14, 0
  %19 = dma.general %s0, 256, %s2, [#allocation2], [#allocation3], [#allocation4], %s16, 0
  %s20 = scalar_lea.hbm %s2, 256
  %s21 = scalar_lea.sflag [#allocation2], 1
  %s23 = sshll.u32 1, 14
  %s24 = sxor.u32 4294967295, %s23
  %s27 = sshll.u32 3, 24
  %s28 = sxor.u32 4294967295, %s27
  %s29 = sand.u32 0, %s28
  %s31 = sor.u32 %s29, 0
  %34 = dma.general %s1, 256, %s20, %s21, [#allocation5], [#allocation6], %s31, 0
  %s35 = smul.u32 2, 1
  %s36 = smul.u32 %s35, 8
  %s37 = sshll.u32 %s36, 4
  %38 = dma.done [#allocation2], %s37
  %s39 = sshll.u32 %s36, 4
  %40 = dma.done %s21, %s39
  %41 = vsyncmov [#allocation2]
  %s42 = vpop.sfrf %41
  %p43 = scmp.eq.s32.totalorder %s42, 0
  %p44 = pneg %p43
  %46 = shalt.err (%p44)
  %s47 = scalar_lea.sflag [#allocation2], 1
  %48 = vsyncmov %s47
  %s49 = vpop.sfrf %48
  %p50 = scmp.eq.s32.totalorder %s49, 0
  %p51 = pneg %p50
  %53 = shalt.err (%p51)

</llo_original>
